<compile_context>
chip_gen: v7x
topology: tpu7x:2x2x1
jax: 0.10.0
libtpu: 0.0.40
codegen_flags: <defaults>
</compile_context>

<pallas_src>
import functools

import jax
import jax.numpy as jnp
from jax.experimental import pallas as pl
from jax.experimental.pallas import tpu as pltpu


def _ce_kernel(logits_ref, target_ref, loss_ref, count_ref, *, n_rows, ignore_index):
    """One row-tile: partial sum of per-token NLL (f32) and count of valid tokens (i32)."""
    i = pl.program_id(0)
    tm, v = logits_ref.shape

    x = logits_ref[...]                               # (tm, V), input dtype (bf16 stays packed)
    tgt = target_ref[...]                             # (tm, 1) int32

    # Numerically stable logsumexp over vocab; the row max cancels against the
    # gathered (x[tgt] - m), so it never needs to be added back.
    m = jnp.max(x, axis=-1, keepdims=True)            # exact in bf16
    xm = x - m                                        # input dtype; reused for exp and gather

    # (1, V) iota broadcast against (tm, 1) targets (saves a full-slab iota).
    col = jax.lax.broadcasted_iota(jnp.int32, (1, v), 1)
    sel = col == tgt                                  # (tm, V) bool via broadcast
    # Exactly one nonzero term per row -> the sum is exact even in bf16.
    tgt_xm = jnp.sum(jnp.where(sel, xm, jnp.zeros_like(xm)),
                     axis=-1, keepdims=True).astype(jnp.float32)      # (tm, 1)

    # exp / accumulate in f32 for accuracy (EUP + VPU).
    lse = jnp.log(jnp.sum(jnp.exp(xm.astype(jnp.float32)),
                          axis=-1, keepdims=True))                    # (tm, 1)

    loss = lse - tgt_xm                               # (tm, 1) per-token NLL

    # Mask tail rows of the last (partial) tile and ignore_index targets.
    # jnp.where (select) is required here: tail rows read undefined logits and a
    # multiply-by-mask formulation could propagate NaN.
    row = jax.lax.broadcasted_iota(jnp.int32, (tm, 1), 0) + i * tm
    valid = (row < n_rows) & (tgt != ignore_index)
    loss = jnp.where(valid, loss, 0.0)

    tile_loss = jnp.sum(loss)                         # f32 scalar
    tile_cnt = jnp.sum(valid.astype(jnp.int32))       # i32 scalar (exact count)

    # Lane-dense (1, 8, 128) output blocks -> unmasked stores, parallel grid.
    loss_ref[...] = jnp.broadcast_to(tile_loss, loss_ref.shape)
    count_ref[...] = jnp.broadcast_to(tile_cnt, count_ref.shape)


def cross_entropy_loss_pallas(logits, target, ntokens, *, tm=None, ignore_index=-100):
    """Equivalent of Loss(criterion=CrossEntropyLoss(), ntokens).forward.

    logits: (..., ntokens) float array (viewed as (-1, ntokens)), f32 or bf16.
    target: (...,) int array of class indices (ignore_index entries skipped).
    Returns scalar mean cross-entropy over valid targets (float32).
    """
    x = logits.reshape(-1, ntokens)                   # input.view(-1, ntokens)
    n = x.shape[0]
    itemsize = jnp.dtype(x.dtype).itemsize

    # dtype-native sublane multiple: 8 for f32, 16 for bf16 (packed 2 rows/sublane).
    sub = 16 if itemsize == 2 else 8

    # Per-generation VMEM budget: v7x has 64 MiB/TC, v5e/v6e have 128 MiB.
    try:
        vmem_cap = int(pltpu.get_tpu_info().vmem_capacity_bytes)
    except Exception:  # pragma: no cover - conservative fallback (v7x per-TC size)
        vmem_cap = 64 << 20
    gen_cap = min(int(vmem_cap * 0.7), 56 << 20)      # ~45 MiB on v7x, 56 MiB on v5e/v6e

    # Per-row working set: double-buffered logits block + ~4 f32 (tm, V) temporaries
    # (x-m, exp, select chain). Sizing against this prevents spills/VMEM overflow,
    # especially for bf16 inputs where the f32 copies dominate.
    per_row_ws = 2 * ntokens * itemsize + 4 * ntokens * 4

    if tm is None:
        tm = max(sub, (gen_cap - (2 << 20)) // per_row_ws)
        tm = min(tm, 1024)
    n_pad_sub = ((n + sub - 1) // sub) * sub
    tm = min(tm, n_pad_sub)                           # no bigger than padded n
    tm = max(sub, (tm // sub) * sub)                  # dtype-native sublane multiple

    num_tiles = pl.cdiv(n, tm)
    n_pad = num_tiles * tm

    # Pad targets so their blocks never read out of bounds; padding = ignored.
    t = target.reshape(-1).astype(jnp.int32)
    t = jnp.pad(t, (0, n_pad - n), constant_values=ignore_index).reshape(n_pad, 1)

    vmem_limit = int(tm * per_row_ws                  # dbl-buffered logits + f32 temps
                     + 2 * tm * 128 * 4               # padded (tm, 1) target blocks
                     + (2 << 20))                     # outputs + slack
    vmem_limit = min(max(vmem_limit, 8 << 20), gen_cap)

    kernel = functools.partial(_ce_kernel, n_rows=n, ignore_index=ignore_index)

    cost = pl.CostEstimate(
        flops=8 * n * ntokens,
        transcendentals=n * ntokens,
        bytes_accessed=n_pad * ntokens * itemsize + n_pad * 4
        + num_tiles * 8 * 128 * 4 * 2,
    )

    loss_part, cnt_part = pl.pallas_call(
        kernel,
        out_shape=(
            jax.ShapeDtypeStruct((num_tiles, 8, 128), jnp.float32),
            jax.ShapeDtypeStruct((num_tiles, 8, 128), jnp.int32),
        ),
        grid_spec=pltpu.PrefetchScalarGridSpec(
            num_scalar_prefetch=0,
            grid=(num_tiles,),
            in_specs=[
                pl.BlockSpec((tm, ntokens), lambda i: (i, 0)),
                pl.BlockSpec((tm, 1), lambda i: (i, 0)),
            ],
            out_specs=[
                pl.BlockSpec((1, 8, 128), lambda i: (i, 0, 0)),
                pl.BlockSpec((1, 8, 128), lambda i: (i, 0, 0)),
            ],
        ),
        compiler_params=pltpu.CompilerParams(
            dimension_semantics=("parallel",),
            vmem_limit_bytes=vmem_limit,
        ),
        cost_estimate=cost,
    )(x, t)

    total_loss = jnp.sum(loss_part[:, 0, 0])
    total_cnt = jnp.sum(cnt_part[:, 0, 0]).astype(jnp.float32)
    # CrossEntropyLoss reduction='mean' divides by the number of valid targets.
    # (All targets ignored -> 0/0 = NaN, matching PyTorch.)
    return (total_loss / total_cnt).astype(jnp.float32)


def _ref_loss(logits, target, ntokens, ignore_index=-100):
    x = logits.reshape(-1, ntokens).astype(jnp.float32)
    t = target.reshape(-1)
    lse = jax.scipy.special.logsumexp(x, axis=-1)
    safe_t = jnp.where(t == ignore_index, 0, t)
    picked = x[jnp.arange(x.shape[0]), safe_t]
    per_row = lse - picked
    valid = t != ignore_index
    return jnp.sum(jnp.where(valid, per_row, 0.0)) / jnp.sum(valid)


if __name__ == "__main__":
    key = jax.random.PRNGKey(0)
    batch, seq, ntokens = 2, 8, 32
    k1, k2 = jax.random.split(key)
    logits = jax.random.normal(k1, (batch, seq, ntokens), dtype=jnp.float32)
    target = jax.random.randint(k2, (batch * seq,), 0, ntokens, dtype=jnp.int32)
    # BERT MLM-style: some positions carry ignore_index=-100.
    target = target.at[0].set(-100).at[5].set(-100)

    loss = jax.block_until_ready(cross_entropy_loss_pallas(logits, target, ntokens))
    ref = _ref_loss(logits, target, ntokens)
    assert jnp.allclose(loss, ref, atol=1e-5, rtol=1e-5), (loss, ref)

    # Tail-masking path: row count (21) not divisible by the row tile (8).
    b2, s2 = 3, 7
    k3, k4 = jax.random.split(k2)
    logits2 = jax.random.normal(k3, (b2, s2, ntokens), dtype=jnp.float32)
    target2 = jax.random.randint(k4, (b2 * s2,), 0, ntokens, dtype=jnp.int32)
    loss2 = jax.block_until_ready(
        cross_entropy_loss_pallas(logits2, target2, ntokens, tm=8))
    ref2 = _ref_loss(logits2, target2, ntokens)
    assert jnp.allclose(loss2, ref2, atol=1e-5, rtol=1e-5), (loss2, ref2)

    # bf16 logits path (packed-sublane tiling + bf16 max/gather, f32 lse).
    b3, s3, v3 = 2, 16, 128
    k5, k6 = jax.random.split(k4)
    logits3 = jax.random.normal(k5, (b3, s3, v3), dtype=jnp.float32).astype(jnp.bfloat16)
    target3 = jax.random.randint(k6, (b3 * s3,), 0, v3, dtype=jnp.int32)
    target3 = target3.at[3].set(-100)
    loss3 = jax.block_until_ready(cross_entropy_loss_pallas(logits3, target3, v3))
    ref3 = _ref_loss(logits3.astype(jnp.float32), target3, v3)
    assert jnp.allclose(loss3, ref3, atol=5e-2, rtol=5e-2), (loss3, ref3)

    print("KERNEL_OK")
</pallas_src>

<mosaic_0001>
module attributes {stable_mosaic.version = 11 : i64} {
  func.func @_ce_kernel(%arg0: i32, %arg1: memref<16x32xf32, #tpu.memory_space<vmem>>, %arg2: memref<16x1xi32, #tpu.memory_space<vmem>>, %arg3: memref<1x8x128xf32, #tpu.memory_space<vmem>>, %arg4: memref<1x8x128xi32, #tpu.memory_space<vmem>>) attributes {dimension_semantics = [#tpu.dimension_semantics<parallel>], iteration_bounds = array<i64: 1>, scalar_prefetch = 0 : i64, scratch_operands = 0 : i64, tpu.core_type = #tpu.core_type<tc>, window_params = [{transform_indices = @transform_0, window_bounds = array<i64: 16, 32>}, {transform_indices = @transform_1, window_bounds = array<i64: 16, 1>}, {transform_indices = @transform_2, window_bounds = array<i64: 1, 8, 128>}, {transform_indices = @transform_3, window_bounds = array<i64: 1, 8, 128>}]} {
    %c0 = arith.constant 0 : index
    %c0_0 = arith.constant 0 : index
    %0 = vector.load %arg1[%c0, %c0_0] : memref<16x32xf32, #tpu.memory_space<vmem>>, vector<16x32xf32>
    %c0_1 = arith.constant 0 : index
    %c0_2 = arith.constant 0 : index
    %1 = vector.load %arg2[%c0_1, %c0_2] : memref<16x1xi32, #tpu.memory_space<vmem>>, vector<16x1xi32>
    %cst = arith.constant dense<0xFF800000> : vector<16xf32>
    %2 = vector.multi_reduction <maximumf>, %0, %cst [1] : vector<16x32xf32> to vector<16xf32>
    %3 = vector.shape_cast %2 : vector<16xf32> to vector<16x1xf32>
    %4 = vector.broadcast %3 : vector<16x1xf32> to vector<16x32xf32>
    %5 = arith.subf %0, %4 : vector<16x32xf32>
    %6 = tpu.iota {dimensions = array<i32: 1>} : vector<1x32xi32>
    %7 = vector.broadcast %6 : vector<1x32xi32> to vector<16x32xi32>
    %8 = vector.broadcast %1 : vector<16x1xi32> to vector<16x32xi32>
    %9 = arith.cmpi eq, %7, %8 : vector<16x32xi32>
    %cst_3 = arith.constant 0.000000e+00 : f32
    %10 = vector.broadcast %cst_3 : f32 to vector<16x32xf32>
    %11 = arith.select %9, %5, %10 : vector<16x32xi1>, vector<16x32xf32>
    %cst_4 = arith.constant dense<0.000000e+00> : vector<16xf32>
    %12 = vector.multi_reduction <add>, %11, %cst_4 [1] : vector<16x32xf32> to vector<16xf32>
    %13 = vector.shape_cast %12 : vector<16xf32> to vector<16x1xf32>
    %14 = math.exp %5 : vector<16x32xf32>
    %cst_5 = arith.constant dense<0.000000e+00> : vector<16xf32>
    %15 = vector.multi_reduction <add>, %14, %cst_5 [1] : vector<16x32xf32> to vector<16xf32>
    %16 = vector.shape_cast %15 : vector<16xf32> to vector<16x1xf32>
    %17 = math.log %16 : vector<16x1xf32>
    %18 = arith.subf %17, %13 : vector<16x1xf32>
    %19 = tpu.iota {dimensions = array<i32: 0>} : vector<16x1xi32>
    %c16_i32 = arith.constant 16 : i32
    %20 = arith.muli %arg0, %c16_i32 : i32
    %21 = vector.broadcast %20 : i32 to vector<16x1xi32>
    %22 = arith.addi %19, %21 : vector<16x1xi32>
    %c16_i32_6 = arith.constant 16 : i32
    %23 = vector.broadcast %c16_i32_6 : i32 to vector<16x1xi32>
    %24 = arith.cmpi slt, %22, %23 : vector<16x1xi32>
    %c-100_i32 = arith.constant -100 : i32
    %25 = vector.broadcast %c-100_i32 : i32 to vector<16x1xi32>
    %26 = arith.cmpi ne, %1, %25 : vector<16x1xi32>
    %27 = arith.andi %24, %26 : vector<16x1xi1>
    %cst_7 = arith.constant 0.000000e+00 : f32
    %28 = vector.broadcast %cst_7 : f32 to vector<16x1xf32>
    %29 = arith.select %27, %18, %28 : vector<16x1xi1>, vector<16x1xf32>
    %30 = vector.shape_cast %29 : vector<16x1xf32> to vector<1x16x1xf32>
    %cst_8 = arith.constant dense<0.000000e+00> : vector<1xf32>
    %31 = vector.multi_reduction <add>, %30, %cst_8 [1, 2] : vector<1x16x1xf32> to vector<1xf32>
    %32 = vector.shape_cast %31 : vector<1xf32> to vector<1x1x1xf32>
    %33 = vector.extract %32[0, 0, 0] : f32 from vector<1x1x1xf32>
    %34 = arith.extui %27 : vector<16x1xi1> to vector<16x1xi32>
    %35 = vector.shape_cast %34 : vector<16x1xi32> to vector<1x16x1xi32>
    %cst_9 = arith.constant dense<0> : vector<1xi32>
    %36 = vector.multi_reduction <add>, %35, %cst_9 [1, 2] : vector<1x16x1xi32> to vector<1xi32>
    %37 = vector.shape_cast %36 : vector<1xi32> to vector<1x1x1xi32>
    %38 = vector.extract %37[0, 0, 0] : i32 from vector<1x1x1xi32>
    %39 = vector.broadcast %33 : f32 to vector<1x8x128xf32>
    %c0_10 = arith.constant 0 : index
    %c0_11 = arith.constant 0 : index
    %c0_12 = arith.constant 0 : index
    %40 = vector.load %arg3[%c0_10, %c0_11, %c0_12] : memref<1x8x128xf32, #tpu.memory_space<vmem>>, vector<1x8x128xf32>
    tpu.vector_store %arg3[%c0_10, %c0_11, %c0_12], %39 {strides = array<i32>} : memref<1x8x128xf32, #tpu.memory_space<vmem>>, vector<1x8x128xf32>,
    %41 = vector.broadcast %38 : i32 to vector<1x8x128xi32>
    %c0_13 = arith.constant 0 : index
    %c0_14 = arith.constant 0 : index
    %c0_15 = arith.constant 0 : index
    %42 = vector.load %arg4[%c0_13, %c0_14, %c0_15] : memref<1x8x128xi32, #tpu.memory_space<vmem>>, vector<1x8x128xi32>
    tpu.vector_store %arg4[%c0_13, %c0_14, %c0_15], %41 {strides = array<i32>} : memref<1x8x128xi32, #tpu.memory_space<vmem>>, vector<1x8x128xi32>,
    return
  }
  func.func @transform_0(%arg0: i32) -> (i32, i32) {
    %c0_i32 = arith.constant 0 : i32
    %c0_i32_0 = arith.constant 0 : i32
    return %arg0, %c0_i32 : i32, i32
  }
  func.func @transform_1(%arg0: i32) -> (i32, i32) {
    %c0_i32 = arith.constant 0 : i32
    %c0_i32_0 = arith.constant 0 : i32
    return %arg0, %c0_i32 : i32, i32
  }
  func.func @transform_2(%arg0: i32) -> (i32, i32, i32) {
    %c0_i32 = arith.constant 0 : i32
    %c0_i32_0 = arith.constant 0 : i32
    %c0_i32_1 = arith.constant 0 : i32
    return %arg0, %c0_i32, %c0_i32_0 : i32, i32, i32
  }
  func.func @transform_3(%arg0: i32) -> (i32, i32, i32) {
    %c0_i32 = arith.constant 0 : i32
    %c0_i32_0 = arith.constant 0 : i32
    %c0_i32_1 = arith.constant 0 : i32
    return %arg0, %c0_i32, %c0_i32_0 : i32, i32, i32
  }
}

</mosaic_0001>

<llo_original>
// kernel: tpu_custom_call.1
$region0: #{tpu_custom_call.1}
  #allocation0 [shape = 'u32[]', space=smem, size = 0x4, offset = 0x4, fixed_abs, tag = 'smem constant byte address 0x4 - core index']
  #allocation1 [shape = 'u32[144,128]{1,0:T(1,128)}', space=vmem, size = 0x12000, scoped, tag = 'internal scratch']
  %s0 = inlined_call_operand.vmem [shape: f32[16,32], index: 0, kind: input, shape index: {}]
  %s1 = inlined_call_operand.vmem [shape: s32[16,1], index: 1, kind: input, shape index: {}]
  %s2 = inlined_call_operand.hbm [shape: f32[1,8,128], index: 2, kind: output, shape index: {0}]
  %s3 = inlined_call_operand.hbm [shape: s32[1,8,128], index: 3, kind: output, shape index: {1}]
  %4 = xla_tuple %s2, %s3
  %s5 = sld [smem:[#allocation0]]
  $region26: #{tpu_custom_call.1} parent=0
    _
  %s7 = ssub.s32 1, %s5
  %s8 = scalar_select 0, %s7, %s5
  $region1: #{tpu_custom_call.1} parent=0
    #allocation2 [shape = 'u8[4096]{0}', space=vmem, size = 0x1000, scoped, tag = 'output window, operand 0, single buffered']
    #allocation3 [shape = 's32[1]{0}', space=sflag, size = 0x4, scoped, tag = 'scoped memory for tpu_custom_call.1']
    #allocation4 [shape = 'u8[4096]{0}', space=vmem, size = 0x1000, scoped, tag = 'output window, operand 1, single buffered']
    #allocation5 [shape = 's32[1]{0}', space=sflag, size = 0x4, scoped, tag = 'scoped memory for tpu_custom_call.1']
    %9 = vsyncpa [#allocation3], 0
    %10 = vsyncpa [#allocation5], 0
    // Predicated region
    $region2: #{tpu_custom_call.1} parent=1 // pred_check
      _
    $region3: #{tpu_custom_call.1} parent=1 // pred_check_branch
      %12 = sbr.rel (0) target = $region5
    $region4: #{tpu_custom_call.1} parent=1 // pred_region
      _
    $region5: #{tpu_custom_call.1} parent=1 // pred_fallthru
      _
    // Predicated region
    $region6: #{tpu_custom_call.1} parent=1 // pred_check
      _
    $region7: #{tpu_custom_call.1} parent=1 // pred_check_branch
      %14 = sbr.rel (0) target = $region9
    $region8: #{tpu_custom_call.1} parent=1 // pred_region
      _
    $region9: #{tpu_custom_call.1} parent=1 // pred_fallthru
      _
    %v15 = vld [vmem:[%s0] sm:$0xff]
    %v16 = vld [vmem:[%s0 + $0x8] sm:$0xff]
    %v17 = vld [vmem:[%s1] sm:$0xff]
    %v18 = vld [vmem:[%s1 + $0x8] sm:$0xff]
    %vm19 = vcmask 261120
    %v20 = vsel %vm19, %v15, -inf
    %21 = vmax.xlane.f32.xlu0 %v20
    %v22 = vpop.xlane.xlu0 %21
    %v23 = vsel %vm19, %v16, -inf
    %24 = vmax.xlane.f32.xlu0 %v23
    %v25 = vpop.xlane.xlu0 %24
    %v26 = vsub.f32 %v15, %v22
    %v27 = vsub.f32 %v16, %v25
    %v28 = vlaneseq
    %v29 = vand.u32 %v28, 127
    %30 = vset.pattern.permute.xlu0 0
    %31 = vperm.xlu0 %30, %v17
    %v32 = vpop.permute.xlu0 %31
    %33 = vset.pattern.permute.xlu0 0
    %34 = vperm.xlu0 %33, %v18
    %v35 = vpop.permute.xlu0 %34
    %vm36 = vcmp.eq.s32.totalorder %v29, %v32
    %vm37 = vcmp.eq.s32.totalorder %v29, %v35
    %v38 = vsel %vm36, %v26, 0.0
    %v39 = vsel %vm37, %v27, 0.0
    %v40 = vsel %vm19, %v38, 0.0
    %41 = vadd.xlane.f32.xlu0 %v40
    %v42 = vpop.xlane.xlu0 %41
    %v43 = vsel %vm19, %v39, 0.0
    %44 = vadd.xlane.f32.xlu0 %v43
    %v45 = vpop.xlane.xlu0 %44
    %v46 = vmul.f32 %v26, 1.442695
    %v47 = vpow.pop %v46
    %v48 = vmul.f32 %v27, 1.442695
    %v49 = vpow.pop %v48
    %v50 = vsel %vm19, %v47, 0.0
    %51 = vadd.xlane.f32.xlu0 %v50
    %v52 = vpop.xlane.xlu0 %51
    %v53 = vsel %vm19, %v49, 0.0
    %54 = vadd.xlane.f32.xlu0 %v53
    %v55 = vpop.xlane.xlu0 %54
    %v56 = vlog2.pop %v52
    %v57 = vmul.f32 %v56, 0.6931472
    %v58 = vlog2.pop %v55
    %v59 = vmul.f32 %v58, 0.6931472
    %v60 = vsub.f32 %v57, %v42
    %v61 = vsub.f32 %v59, %v45
    %v62 = vlaneseq
    %v63 = vshrl.u32 %v62, 7
    %v64 = vadd.s32 %v63, 8
    %s65 = smul.u32 0, 16
    %v66 = vstv %s65
    %v67 = vadd.s32 %v63, %v66
    %v68 = vadd.s32 %v64, %v66
    %vm69 = vcmp.lt.s32.totalorder %v67, 16
    %vm70 = vcmp.lt.s32.totalorder %v68, 16
    %vm71 = vcmp.ne.s32.totalorder %v17, 4294967196
    %vm72 = vcmp.ne.s32.totalorder %v18, 4294967196
    %vm73 = vmand %vm69, %vm71
    %vm74 = vmand %vm70, %vm72
    %v75 = vsel %vm73, %v60, 0.0
    %v76 = vsel %vm74, %v61, 0.0
    %vm77 = vcmask 7168
    %v78 = vsel %vm77, %v75, 0.0
    %v79 = vsel %vm77, %v76, 0.0
    %v80 = vadd.f32 %v78, %v79
    %81 = vadd.xlane.f32.xlu0 %v80
    %v82 = vpop.xlane.xlu0 %81
    %v83 = vrot.slane %v82, 4
    %v84 = vadd.f32 %v82, %v83
    %v85 = vrot.slane %v84, 2
    %v86 = vadd.f32 %v84, %v85
    %v87 = vrot.slane %v86, 1
    %v88 = vadd.f32 %v86, %v87
    %s89 = vtos %v88
    %v90 = vsel %vm73, 1, 0
    %v91 = vsel %vm74, 1, 0
    %v92 = vsel %vm77, %v90, 0
    %v93 = vsel %vm77, %v91, 0
    %v94 = vadd.s32 %v92, %v93
    %v95 = vand.u32 %v94, 65535
    %v96 = vshrl.u32 %v94, 16
    %v97 = vcvt.s32.f32 %v95
    %v98 = vcvt.s32.f32 %v96
    %99 = vadd.xlane.f32.xlu0 %v97
    %v100 = vpop.xlane.xlu0 %99
    %101 = vadd.xlane.f32.xlu0 %v98
    %v102 = vpop.xlane.xlu0 %101
    %v103 = vcvt.f32.s32 %v100
    %v104 = vcvt.f32.s32 %v102
    %v105 = vshll.u32 %v104, 16
    %v106 = vadd.s32 %v105, %v103
    %v107 = vrot.slane %v106, 4
    %v108 = vadd.s32 %v106, %v107
    %v109 = vrot.slane %v108, 2
    %v110 = vadd.s32 %v108, %v109
    %v111 = vrot.slane %v110, 1
    %v112 = vadd.s32 %v110, %v111
    %s113 = vtos %v112
    %v114 = vstv %s89
    %115 = vst [vmem:[#allocation2] sm:$0xff] %v114
    %v116 = vstv %s113
    %117 = vst [vmem:[#allocation4] sm:$0xff] %v116
    // Predicated region
    $region10: #{tpu_custom_call.1} parent=1 // pred_check
      _
    $region11: #{tpu_custom_call.1} parent=1 // pred_check_branch
      %119 = sbr.rel (0) target = $region13
    $region12: #{tpu_custom_call.1} parent=1 // pred_region
      %s121 = ssub.s32 128, 128
      %122 = vsyncadd [#allocation3], %s121
      %s124 = sshll.u32 [#allocation2], 4
      %s125 = int_to_ptr.vmem [resolvable:$true] %s124
      %127 = dma.vmem_to_hbm [thread:$0]  %s125, 128, %s2, [#allocation3]
    $region13: #{tpu_custom_call.1} parent=1 // pred_fallthru
      _
    // Predicated region
    $region14: #{tpu_custom_call.1} parent=1 // pred_check
      _
    $region15: #{tpu_custom_call.1} parent=1 // pred_check_branch
      %129 = sbr.rel (0) target = $region17
    $region16: #{tpu_custom_call.1} parent=1 // pred_region
      %s131 = ssub.s32 128, 128
      %132 = vsyncadd [#allocation5], %s131
      %s134 = sshll.u32 [#allocation4], 4
      %s135 = int_to_ptr.vmem [resolvable:$true] %s134
      %137 = dma.vmem_to_hbm [thread:$0]  %s135, 128, %s3, [#allocation5]
    $region17: #{tpu_custom_call.1} parent=1 // pred_fallthru
      _
    // Predicated region
    $region18: #{tpu_custom_call.1} parent=1 // pred_check
      _
    $region19: #{tpu_custom_call.1} parent=1 // pred_check_branch
      %139 = sbr.rel (0) target = $region21
    $region20: #{tpu_custom_call.1} parent=1 // pred_region
      %140 = dma.done [#allocation3], 128
    $region21: #{tpu_custom_call.1} parent=1 // pred_fallthru
      _
    // Predicated region
    $region22: #{tpu_custom_call.1} parent=1 // pred_check
      _
    $region23: #{tpu_custom_call.1} parent=1 // pred_check_branch
      %142 = sbr.rel (0) target = $region25
    $region24: #{tpu_custom_call.1} parent=1 // pred_region
      %143 = dma.done [#allocation5], 128
    $region25: #{tpu_custom_call.1} parent=1 // pred_fallthru
      _
    %144 = vsyncpa [#allocation3], 1
    %145 = vsyncpa [#allocation5], 1

</llo_original>
